<compile_context>
chip_gen: v6e
topology: v6e:2x2x1
jax: 0.10.0
libtpu: 0.0.40
codegen_flags: <defaults>
</compile_context>

<pallas_src>
import functools

import jax
import jax.numpy as jnp
from jax.experimental import pallas as pl
from jax.experimental.pallas import tpu as pltpu


# ---------------------------------------------------------------------------
# Generation-aware VMEM budget (v7x: 64 MiB/TC, v5e/v6e: 128 MiB)
# ---------------------------------------------------------------------------
def _vmem_budget():
    """Returns (per-buffer tile target bytes, scoped vmem_limit_bytes)."""
    try:
        cap = int(pltpu.get_tpu_info().vmem_capacity_bytes)
    except Exception:
        cap = 64 << 20                      # conservative fallback (v7x-sized)
    if cap <= (64 << 20):                   # v7x: smaller tiles, lower cap
        return 3 << 20, 20 << 20
    return 8 << 20, 48 << 20                # v5e / v6e: big tiles amortize step overhead


def _round_down(x: int, m: int) -> int:
    return (x // m) * m


def _pick_spatial_tile(S: int, C: int, itemsize: int, target_bytes: int, batch: int) -> int:
    """Largest multiple-of-128 spatial tile within ~target_bytes per buffer,
    with >= 2 total grid steps so both v7x TensorCores get work."""
    tile = max(_round_down(target_bytes // (C * itemsize), 128), 128)
    if tile >= S:
        tile = S
    if batch * pl.cdiv(S, tile) < 2 and S > 128:
        tile = max(128, _round_down(pl.cdiv(S, 2), 128))
    return tile


def _pick_row_tile(H: int, W: int, itemsize: int, target_bytes: int, batch: int) -> int:
    """Row tile (multiple of 8 sublanes) for the upsample output block."""
    th = max(_round_down(target_bytes // (W * itemsize), 8), 8)
    if th >= H:
        th = H
    if batch * pl.cdiv(H, th) < 2 and H > 8:
        th = max(8, _round_down(pl.cdiv(H, 2), 8))
    return th


# ---------------------------------------------------------------------------
# Interpolation matrix for F.interpolate(mode='bilinear', align_corners=False)
# ---------------------------------------------------------------------------
def _interp_matrix(out_size: int, in_size: int) -> jnp.ndarray:
    """Row-interpolation matrix M (out_size, in_size): out = M @ x."""
    scale = in_size / out_size
    s = (jnp.arange(out_size, dtype=jnp.float32) + 0.5) * scale - 0.5
    s = jnp.maximum(s, 0.0)                                   # PyTorch clamps src >= 0
    i0 = jnp.minimum(jnp.floor(s).astype(jnp.int32), in_size - 1)
    i1 = jnp.minimum(i0 + 1, in_size - 1)
    lam = s - i0.astype(jnp.float32)
    rows = jnp.arange(out_size)
    m = jnp.zeros((out_size, in_size), jnp.float32)
    m = m.at[rows, i0].add(1.0 - lam)
    m = m.at[rows, i1].add(lam)
    return m


# ---------------------------------------------------------------------------
# Kernel 1: row-tiled bilinear residual upsample + ReLU (scale folded into WcT)
# ---------------------------------------------------------------------------
def _upsample_relu_kernel(d_ref,     # (1, h, w) f32
                          wr_ref,    # (TH, h)   f32 (row-tile of the H x h matrix)
                          wct_ref,   # (w, W)    f32, already multiplied by scale_factor
                          o_ref):    # (1, TH, W)
    d = d_ref[0]                                                           # (h, w)
    tmp = jnp.dot(wr_ref[...], d, preferred_element_type=jnp.float32)      # (TH, w)
    up = jnp.dot(tmp, wct_ref[...], preferred_element_type=jnp.float32)    # (TH, W)
    o_ref[0] = jnp.maximum(up, 0.0).astype(o_ref.dtype)


# ---------------------------------------------------------------------------
# Kernel 2: streaming per-channel gate multiply on left_sem (native NCHW layout)
# ---------------------------------------------------------------------------
def _gate_mul_kernel(sem_ref,    # (1, C, S_tile)  sem dtype (f32 or bf16)
                     gate_ref,   # (1, C, 1)       f32 column, broadcasts over lanes
                     out_ref):   # (1, C, S_tile)  same dtype as sem
    out_ref[...] = (sem_ref[...] * gate_ref[...]).astype(out_ref.dtype)


# ---------------------------------------------------------------------------
# Wrapper: gate math in plain JAX + two pallas_calls
# ---------------------------------------------------------------------------
def refine_forward(low_disp, left_img, left_sem, key_w, key_b, conv_w, *,
                   donate_sem: bool = False):
    """low_disp: (B, h, w); left_img: (B, 3, H, W); left_sem: (B, C, Hs, Ws) NCHW.

    Pass left_sem as bf16 to halve HBM traffic on the dominant stream.
    donate_sem=True writes the gated sem in place (pair with jit donation of left_sem).
    """
    B, h, w = low_disp.shape
    H, W = left_img.shape[-2], left_img.shape[-1]
    _, C, Hs, Ws = left_sem.shape
    scale_factor = W / w

    tile_target, vmem_limit = _vmem_budget()

    # ---- tiny per-channel gate (B, C) in plain JAX -------------------------
    # avg_pool(key_conv(x))[b, c] = key_w[c] * mean(x[b]) + key_b[c]  (1x1 conv is linear)
    ld32 = low_disp.astype(jnp.float32)
    mean = jnp.mean(ld32.reshape(B, -1), axis=1)                         # (B,)
    y = key_w.reshape(1, C).astype(jnp.float32) * mean[:, None] \
        + key_b.reshape(1, C).astype(jnp.float32)                        # (B, C)
    # Conv1d(1, 1, k=3, padding=1, bias=False) along the channel axis (ECA gate).
    ypad = jnp.pad(y, ((0, 0), (1, 1)))
    cw = conv_w.astype(jnp.float32)
    z = cw[0] * ypad[:, :-2] + cw[1] * ypad[:, 1:-1] + cw[2] * ypad[:, 2:]
    gate = jax.nn.sigmoid(z)                                             # (B, C) f32

    # ---- Pallas kernel 1: bilinear residual upsample + ReLU (row-tiled) ----
    wr = _interp_matrix(H, h)                                            # (H, h)
    wct = _interp_matrix(W, w).T * jnp.float32(scale_factor)             # (w, W), scale folded in
    th = _pick_row_tile(H, W, 4, min(tile_target, 4 << 20), B)
    n_r = pl.cdiv(H, th)
    disp = pl.pallas_call(
        _upsample_relu_kernel,
        out_shape=jax.ShapeDtypeStruct((B, H, W), low_disp.dtype),
        grid=(B, n_r),
        in_specs=[
            pl.BlockSpec((1, h, w), lambda b, r: (b, 0, 0)),
            pl.BlockSpec((th, h), lambda b, r: (r, 0)),
            pl.BlockSpec((w, W), lambda b, r: (0, 0)),
        ],
        out_specs=pl.BlockSpec((1, th, W), lambda b, r: (b, r, 0)),
        compiler_params=pltpu.CompilerParams(
            dimension_semantics=("parallel", "parallel"),
            vmem_limit_bytes=vmem_limit,
        ),
    )(ld32, wr, wct)

    # ---- Pallas kernel 2: stream left_sem * gate (NCHW, no transposes) -----
    S = Hs * Ws
    sem_flat = left_sem.reshape(B, C, S)            # free reshape of contiguous dims
    itemsize = jnp.dtype(left_sem.dtype).itemsize
    s_tile = _pick_spatial_tile(S, C, itemsize, tile_target, B)
    n_s = pl.cdiv(S, s_tile)
    gate_col = gate.reshape(B, C, 1)                # (C, 1) column broadcasts over lanes

    sem_out_flat = pl.pallas_call(
        _gate_mul_kernel,
        out_shape=jax.ShapeDtypeStruct((B, C, S), left_sem.dtype),
        grid=(B, n_s),
        in_specs=[
            pl.BlockSpec((1, C, s_tile), lambda b, s: (b, 0, s)),
            pl.BlockSpec((1, C, 1), lambda b, s: (b, 0, 0)),
        ],
        out_specs=pl.BlockSpec((1, C, s_tile), lambda b, s: (b, 0, s)),
        compiler_params=pltpu.CompilerParams(
            dimension_semantics=("parallel", "parallel"),
            vmem_limit_bytes=vmem_limit,
        ),
        # In-place gating when the caller donates left_sem (saves an HBM alloc).
        input_output_aliases=({0: 0} if donate_sem else {}),
    )(sem_flat, gate_col)

    sem = sem_out_flat.reshape(B, C, Hs, Ws)
    return disp, sem


# ---------------------------------------------------------------------------
# Pure-JAX reference (direct translation of the PyTorch forward) for checking
# ---------------------------------------------------------------------------
def _ref_forward(low_disp, left_img, left_sem, key_w, key_b, conv_w):
    B, h, w = low_disp.shape
    H, W = left_img.shape[-2], left_img.shape[-1]
    scale_factor = W / w

    mean = jnp.mean(low_disp.reshape(B, -1), axis=1)
    y = key_w[None, :] * mean[:, None] + key_b[None, :]
    ypad = jnp.pad(y, ((0, 0), (1, 1)))
    z = conv_w[0] * ypad[:, :-2] + conv_w[1] * ypad[:, 1:-1] + conv_w[2] * ypad[:, 2:]
    sig = jax.nn.sigmoid(z)
    sem = left_sem * sig[:, :, None, None]

    def coords(out_size, in_size):
        scale = in_size / out_size
        s = (jnp.arange(out_size, dtype=jnp.float32) + 0.5) * scale - 0.5
        s = jnp.maximum(s, 0.0)
        i0 = jnp.minimum(jnp.floor(s).astype(jnp.int32), in_size - 1)
        i1 = jnp.minimum(i0 + 1, in_size - 1)
        return i0, i1, s - i0.astype(jnp.float32)

    r0, r1, lr = coords(H, h)
    c0, c1, lc = coords(W, w)
    v00 = low_disp[:, r0[:, None], c0[None, :]]
    v01 = low_disp[:, r0[:, None], c1[None, :]]
    v10 = low_disp[:, r1[:, None], c0[None, :]]
    v11 = low_disp[:, r1[:, None], c1[None, :]]
    lr_ = lr[None, :, None]
    lc_ = lc[None, None, :]
    up = (1 - lr_) * ((1 - lc_) * v00 + lc_ * v01) + lr_ * ((1 - lc_) * v10 + lc_ * v11)
    disp = jnp.maximum(up, 0.0) * scale_factor
    return disp, sem


if __name__ == "__main__":
    # Small shapes consistent with the module: left_img spatial = 4x the low-res
    # disparity ("H, W divisible by 16"); left_sem has 128 channels (fixed by the
    # module's 128-channel semantic head / gate).
    B, h, w = 2, 8, 8
    H, W = 32, 32
    C = 128

    key = jax.random.PRNGKey(0)
    k1, k2, k3, k4, k5, k6 = jax.random.split(key, 6)

    key_w = jax.random.normal(k1, (C,), jnp.float32) * 0.1   # Conv2d(1, 128, 1) weight
    key_b = jax.random.normal(k2, (C,), jnp.float32) * 0.1   # Conv2d(1, 128, 1) bias
    conv_w = jax.random.normal(k3, (3,), jnp.float32) * 0.5  # Conv1d(1, 1, 3, bias=False)

    low_disp = jax.random.normal(k4, (B, h, w), jnp.float32) * 4.0
    left_img = jax.random.normal(k5, (B, 3, H, W), jnp.float32)
    left_sem = jax.random.normal(k6, (B, C, H, W), jnp.float32)

    # --- f32 path: tight correctness check against the pure-JAX reference ---
    fwd = jax.jit(refine_forward)
    disp, sem = fwd(low_disp, left_img, left_sem, key_w, key_b, conv_w)
    jax.block_until_ready((disp, sem))

    disp_ref, sem_ref = _ref_forward(low_disp, left_img, left_sem, key_w, key_b, conv_w)
    assert disp.shape == (B, H, W) and sem.shape == (B, C, H, W)
    assert jnp.allclose(disp, disp_ref, atol=1e-4, rtol=1e-4)
    assert jnp.allclose(sem, sem_ref, atol=1e-4, rtol=1e-4)

    # --- bf16 streaming path with in-place (donated) left_sem ----------------
    # Halves HBM traffic on the dominant, bandwidth-bound sem stream.
    fwd_bf16 = jax.jit(functools.partial(refine_forward, donate_sem=True),
                       donate_argnums=(2,))
    left_sem_bf16 = left_sem.astype(jnp.bfloat16)
    disp2, sem2 = fwd_bf16(low_disp, left_img, left_sem_bf16, key_w, key_b, conv_w)
    jax.block_until_ready((disp2, sem2))
    assert sem2.dtype == jnp.bfloat16
    assert jnp.allclose(disp2, disp_ref, atol=1e-4, rtol=1e-4)
    assert jnp.allclose(sem2.astype(jnp.float32), sem_ref, atol=3e-2, rtol=3e-2)

    print("KERNEL_OK")
</pallas_src>

<mosaic_0001>
module attributes {stable_mosaic.version = 11 : i64} {
  func.func private @main(%arg0: i32) attributes {dimension_semantics = [#tpu.dimension_semantics<core_parallel>], iteration_bounds = array<i64: 2>, tpu.core_type = #tpu.core_type<sc_scalar_subcore>, window_params = []} {
    return
  }
}

module attributes {stable_mosaic.version = 11 : i64} {
  func.func private @main(%arg0: i32) attributes {dimension_semantics = [#tpu.dimension_semantics<core_parallel>], iteration_bounds = array<i64: 2>, tpu.core_type = #tpu.core_type<sc_scalar_subcore>, window_params = []} {
    return
  }
}

module attributes {stable_mosaic.version = 11 : i64} {
  func.func @_gate_mul_kernel(%arg0: i32, %arg1: i32, %arg2: memref<1x128x1024xf32, #tpu.memory_space<vmem>>, %arg3: memref<1x128x1xf32, #tpu.memory_space<vmem>>, %arg4: memref<1x128x1024xf32, #tpu.memory_space<vmem>>) attributes {dimension_semantics = [#tpu.dimension_semantics<parallel>, #tpu.dimension_semantics<parallel>], iteration_bounds = array<i64: 2, 1>, scalar_prefetch = 0 : i64, scratch_operands = 0 : i64, tpu.core_type = #tpu.core_type<tc>, window_params = [{transform_indices = @transform_0, window_bounds = array<i64: 1, 128, 1024>}, {transform_indices = @transform_1, window_bounds = array<i64: 1, 128, 1>}, {transform_indices = @transform_2, window_bounds = array<i64: 1, 128, 1024>}]} {
    %c0 = arith.constant 0 : index
    %c0_0 = arith.constant 0 : index
    %c0_1 = arith.constant 0 : index
    %0 = vector.load %arg2[%c0, %c0_0, %c0_1] : memref<1x128x1024xf32, #tpu.memory_space<vmem>>, vector<1x128x1024xf32>
    %c0_2 = arith.constant 0 : index
    %c0_3 = arith.constant 0 : index
    %c0_4 = arith.constant 0 : index
    %1 = vector.load %arg3[%c0_2, %c0_3, %c0_4] : memref<1x128x1xf32, #tpu.memory_space<vmem>>, vector<1x128x1xf32>
    %2 = vector.broadcast %1 : vector<1x128x1xf32> to vector<1x128x1024xf32>
    %3 = arith.mulf %0, %2 : vector<1x128x1024xf32>
    %c0_5 = arith.constant 0 : index
    %c0_6 = arith.constant 0 : index
    %c0_7 = arith.constant 0 : index
    %4 = vector.load %arg4[%c0_5, %c0_6, %c0_7] : memref<1x128x1024xf32, #tpu.memory_space<vmem>>, vector<1x128x1024xf32>
    tpu.vector_store %arg4[%c0_5, %c0_6, %c0_7], %3 {strides = array<i32>} : memref<1x128x1024xf32, #tpu.memory_space<vmem>>, vector<1x128x1024xf32>,
    return
  }
  func.func @transform_0(%arg0: i32, %arg1: i32) -> (i32, i32, i32) {
    %c0_i32 = arith.constant 0 : i32
    %c0_i32_0 = arith.constant 0 : i32
    return %arg0, %c0_i32, %arg1 : i32, i32, i32
  }
  func.func @transform_1(%arg0: i32, %arg1: i32) -> (i32, i32, i32) {
    %c0_i32 = arith.constant 0 : i32
    %c0_i32_0 = arith.constant 0 : i32
    %c0_i32_1 = arith.constant 0 : i32
    return %arg0, %c0_i32, %c0_i32_0 : i32, i32, i32
  }
  func.func @transform_2(%arg0: i32, %arg1: i32) -> (i32, i32, i32) {
    %c0_i32 = arith.constant 0 : i32
    %c0_i32_0 = arith.constant 0 : i32
    return %arg0, %c0_i32, %arg1 : i32, i32, i32
  }
}

module attributes {stable_mosaic.version = 11 : i64} {
  func.func @_upsample_relu_kernel(%arg0: i32, %arg1: i32, %arg2: memref<1x8x8xf32, #tpu.memory_space<vmem>>, %arg3: memref<32x8xf32, #tpu.memory_space<vmem>>, %arg4: memref<8x32xf32, #tpu.memory_space<vmem>>, %arg5: memref<1x32x32xf32, #tpu.memory_space<vmem>>) attributes {dimension_semantics = [#tpu.dimension_semantics<parallel>, #tpu.dimension_semantics<parallel>], iteration_bounds = array<i64: 2, 1>, scalar_prefetch = 0 : i64, scratch_operands = 0 : i64, tpu.core_type = #tpu.core_type<tc>, window_params = [{transform_indices = @transform_0, window_bounds = array<i64: 1, 8, 8>}, {transform_indices = @transform_1, window_bounds = array<i64: 32, 8>}, {pipeline_mode = #tpu.pipeline_mode<synchronous>, transform_indices = @transform_2, window_bounds = array<i64: 8, 32>}, {transform_indices = @transform_3, window_bounds = array<i64: 1, 32, 32>}]} {
    %c0 = arith.constant 0 : index
    %c0_0 = arith.constant 0 : index
    %c0_1 = arith.constant 0 : index
    %0 = vector.load %arg2[%c0, %c0_0, %c0_1] : memref<1x8x8xf32, #tpu.memory_space<vmem>>, vector<1x8x8xf32>
    %1 = vector.shape_cast %0 : vector<1x8x8xf32> to vector<8x8xf32>
    %c0_2 = arith.constant 0 : index
    %c0_3 = arith.constant 0 : index
    %2 = vector.load %arg3[%c0_2, %c0_3] : memref<32x8xf32, #tpu.memory_space<vmem>>, vector<32x8xf32>
    %cst = arith.constant dense<0.000000e+00> : vector<32x8xf32>
    %3 = tpu.matmul %2, %1, %cst {dimension_numbers = #tpu.dot_dimension_numbers<[1], [0], [0], [1], [0, 0, 1, 1], [], []>} : vector<32x8xf32>, vector<8x8xf32>, vector<32x8xf32> -> vector<32x8xf32>
    %c0_4 = arith.constant 0 : index
    %c0_5 = arith.constant 0 : index
    %4 = vector.load %arg4[%c0_4, %c0_5] : memref<8x32xf32, #tpu.memory_space<vmem>>, vector<8x32xf32>
    %cst_6 = arith.constant dense<0.000000e+00> : vector<32x32xf32>
    %5 = tpu.matmul %3, %4, %cst_6 {dimension_numbers = #tpu.dot_dimension_numbers<[1], [0], [0], [1], [0, 0, 1, 1], [], []>} : vector<32x8xf32>, vector<8x32xf32>, vector<32x32xf32> -> vector<32x32xf32>
    %cst_7 = arith.constant 0.000000e+00 : f32
    %6 = vector.broadcast %cst_7 : f32 to vector<32x32xf32>
    %7 = arith.maximumf %5, %6 : vector<32x32xf32>
    %c0_8 = arith.constant 0 : index
    %c0_9 = arith.constant 0 : index
    %c0_10 = arith.constant 0 : index
    %8 = vector.load %arg5[%c0_8, %c0_9, %c0_10] : memref<1x32x32xf32, #tpu.memory_space<vmem>>, vector<1x32x32xf32>
    %9 = vector.shape_cast %8 : vector<1x32x32xf32> to vector<32x32xf32>
    %10 = vector.shape_cast %7 : vector<32x32xf32> to vector<1x32x32xf32>
    tpu.vector_store %arg5[%c0_8, %c0_9, %c0_10], %10 {strides = array<i32>} : memref<1x32x32xf32, #tpu.memory_space<vmem>>, vector<1x32x32xf32>,
    return
  }
  func.func @transform_0(%arg0: i32, %arg1: i32) -> (i32, i32, i32) {
    %c0_i32 = arith.constant 0 : i32
    %c0_i32_0 = arith.constant 0 : i32
    %c0_i32_1 = arith.constant 0 : i32
    return %arg0, %c0_i32, %c0_i32_0 : i32, i32, i32
  }
  func.func @transform_1(%arg0: i32, %arg1: i32) -> (i32, i32) {
    %c0_i32 = arith.constant 0 : i32
    %c0_i32_0 = arith.constant 0 : i32
    return %arg1, %c0_i32 : i32, i32
  }
  func.func @transform_2(%arg0: i32, %arg1: i32) -> (i32, i32) {
    %c0_i32 = arith.constant 0 : i32
    %c0_i32_0 = arith.constant 0 : i32
    %c0_i32_1 = arith.constant 0 : i32
    return %c0_i32, %c0_i32_0 : i32, i32
  }
  func.func @transform_3(%arg0: i32, %arg1: i32) -> (i32, i32, i32) {
    %c0_i32 = arith.constant 0 : i32
    %c0_i32_0 = arith.constant 0 : i32
    return %arg0, %arg1, %c0_i32 : i32, i32, i32
  }
}

</mosaic_0001>

<llo_original>
// kernel: refine_forward.3
$region0: #{refine_forward.3}
  #allocation0 [shape = 'u32[]', space=smem, size = 0x4, offset = 0x4, fixed_abs, tag = 'smem constant byte address 0x4 - core index']
  #allocation1 [shape = 'u32[144,128]{1,0:T(1,128)}', space=vmem, size = 0x12000, scoped, tag = 'internal scratch']
  %s0 = inlined_call_operand.vmem [shape: f32[2,128,1024], index: 0, kind: input, shape index: {}]
  %s1 = inlined_call_operand.vmem [shape: f32[2,128,1], index: 1, kind: input, shape index: {}]
  %s2 = inlined_call_operand.vmem [shape: f32[2,128,1024], index: 2, kind: output, shape index: {}]
  %s3 = sld [smem:[#allocation0]]
  $region41: #{refine_forward.3} parent=0
    _
  %s5 = ssub.s32 1, %s3
  %s6 = scalar_select 0, %s5, %s3
  loop: start=0, step=1, limit=4
  $region2: #{refine_forward.3} parent=0 // loop_pre_header
    _
  $region3: #{refine_forward.3} parent=0 // loop_header
    %s8 = sphi 0, %s12
    %p9 = scmp.ge.s32.totalorder %s8, 4
    %s15 = sphi 0, %s27
    %s16 = sphi 0, %s23
    %s17 = sphi 0, %s15
    %s18 = sphi 0, %s16
    %s19 = sphi 0, %s17
    %s20 = sphi 0, %s18
    %s32 = sphi 0, %s34
    %s35 = sphi 0, %s32
    %s36 = sphi 0, %s35
    %s52 = sphi 0, %s36
    %s58 = sphi 0, %s60
    %s61 = sphi 0, %s58
    %s62 = sphi 0, %s61
    %s78 = sphi 0, %s62
    %s86 = sphi 0, %s88
    %s89 = sphi 0, %s86
    %s90 = sphi 0, %s89
    %s106 = sphi 0, %s90
  $region4: #{refine_forward.3} parent=0 // loop_header_branch
    %11 = sbr.rel (%p9) target = $region8
  $region5: #{refine_forward.3} parent=0 // loop_body
    %s13 = ssub.s32 %s8, 1
    %s14 = ssub.s32 %s8, 2
    %s21 = sadd.s32 1, %s16
    %p22 = scmp.ge.s32.totalorder %s21, 1
    %s23 = scalar_select %p22, 0, %s21
    %s24 = sadd.s32 1, %s15
    %s25 = scalar_select %p22, %s24, %s15
    %p26 = scmp.ge.s32.totalorder %s25, 2
    %s27 = scalar_select %p26, 0, %s25
    %s28 = ssub.s32 %s15, %s27
    %s29 = ssub.s32 %s16, %s23
    %s30 = sor.u32 %s28, %s29
    %p31 = scmp.eq.s32.totalorder %s30, 0
    %s33 = sadd.s32 %s32, 1
    %s34 = scalar_select %p31, %s32, %s33
    %p37 = pneg %p31
    %p38 = scmp.eq.s32.totalorder %s8, 1
    %p39 = por %p37, %p38
    %p40 = scmp.ne.s32.totalorder %s32, %s35
    %p41 = scmp.eq.s32.totalorder %s8, 0
    %p42 = por %p40, %p41
    %p43 = scmp.ne.s32.totalorder %s32, %s35
    %p44 = scmp.eq.s32.totalorder %s13, 1
    %p45 = por %p43, %p44
    %p46 = scmp.ne.s32.totalorder %s35, %s36
    %p47 = scmp.eq.s32.totalorder %s13, 0
    %p48 = por %p46, %p47
    %p49 = scmp.ne.s32.totalorder %s35, %s36
    %p50 = scmp.eq.s32.totalorder %s14, 1
    %p51 = por %p49, %p50
    %p53 = scmp.ne.s32.totalorder %s36, %s52
    %p54 = scmp.eq.s32.totalorder %s14, 0
    %p55 = por %p53, %p54
    %s56 = ssub.s32 %s15, %s27
    %p57 = scmp.eq.s32.totalorder %s56, 0
    %s59 = sadd.s32 %s58, 1
    %s60 = scalar_select %p57, %s58, %s59
    %p63 = pneg %p57
    %p64 = scmp.eq.s32.totalorder %s8, 1
    %p65 = por %p63, %p64
    %p66 = scmp.ne.s32.totalorder %s58, %s61
    %p67 = scmp.eq.s32.totalorder %s8, 0
    %p68 = por %p66, %p67
    %p69 = scmp.ne.s32.totalorder %s58, %s61
    %p70 = scmp.eq.s32.totalorder %s13, 1
    %p71 = por %p69, %p70
    %p72 = scmp.ne.s32.totalorder %s61, %s62
    %p73 = scmp.eq.s32.totalorder %s13, 0
    %p74 = por %p72, %p73
    %p75 = scmp.ne.s32.totalorder %s61, %s62
    %p76 = scmp.eq.s32.totalorder %s14, 1
    %p77 = por %p75, %p76
    %p79 = scmp.ne.s32.totalorder %s62, %s78
    %p80 = scmp.eq.s32.totalorder %s14, 0
    %p81 = por %p79, %p80
    %s82 = ssub.s32 %s15, %s27
    %s83 = ssub.s32 %s16, %s23
    %s84 = sor.u32 %s82, %s83
    %p85 = scmp.eq.s32.totalorder %s84, 0
    %s87 = sadd.s32 %s86, 1
    %s88 = scalar_select %p85, %s86, %s87
    %p91 = pneg %p85
    %p92 = scmp.eq.s32.totalorder %s8, 1
    %p93 = por %p91, %p92
    %p94 = scmp.ne.s32.totalorder %s86, %s89
    %p95 = scmp.eq.s32.totalorder %s8, 0
    %p96 = por %p94, %p95
    %p97 = scmp.ne.s32.totalorder %s86, %s89
    %p98 = scmp.eq.s32.totalorder %s13, 1
    %p99 = por %p97, %p98
    %p100 = scmp.ne.s32.totalorder %s89, %s90
    %p101 = scmp.eq.s32.totalorder %s13, 0
    %p102 = por %p100, %p101
    %p103 = scmp.ne.s32.totalorder %s89, %s90
    %p104 = scmp.eq.s32.totalorder %s14, 1
    %p105 = por %p103, %p104
    %p107 = scmp.ne.s32.totalorder %s90, %s106
    %p108 = scmp.eq.s32.totalorder %s14, 0
    %p109 = por %p107, %p108
    %p110 = scmp.le.s32.totalorder 1, %s8
    %p111 = scmp.lt.s32.totalorder %s8, 3
    %p112 = pnand %p110, %p111
    %p113 = pneg %p112
    // Predicated region
    $region9: #{refine_forward.3} parent=5 // pred_check
      _
    $region10: #{refine_forward.3} parent=5 // pred_check_branch
      %115 = sbr.rel (%p112) target = $region12
    $region11: #{refine_forward.3} parent=5 // pred_region
      %s116 = ssub.s32 %s8, 1
    $region12: #{refine_forward.3} parent=5 // pred_fallthru
      _
    %p117 = scmp.lt.s32.totalorder %s8, 2
    // Predicated region
    $region13: #{refine_forward.3} parent=5 // pred_check
      %p118 = pneg %p117
    $region14: #{refine_forward.3} parent=5 // pred_check_branch
      %120 = sbr.rel (%p118) target = $region16
    $region15: #{refine_forward.3} parent=5 // pred_region
      // Predicated region
      $region17: #{refine_forward.3} parent=15 // pred_check
        %p121 = pneg %p42
      $region18: #{refine_forward.3} parent=15 // pred_check_branch
        %123 = sbr.rel (%p121) target = $region20
      $region19: #{refine_forward.3} parent=15 // pred_region
        %s124 = smul.u32 8, %s16
        %p125 = scmp.lt.s32.totalorder %s15, 1
        %s126 = scalar_select %p125, %s15, 1
        %p127 = scmp.lt.s32.totalorder %s124, 7
        %s128 = scalar_select %p127, %s124, 7
        %s129 = smul.addr %s126, 128
        %s130 = sadd.s32 %s128, %s129
        %s131 = smul.addr %s130, 8
        %s132 = scalar_lea.vmem %s0, %s131
        %s133 = smul.u32 8, %s16
      $region20: #{refine_forward.3} parent=15 // pred_fallthru
        _
      // Predicated region
      $region21: #{refine_forward.3} parent=15 // pred_check
        %p134 = pneg %p68
      $region22: #{refine_forward.3} parent=15 // pred_check_branch
        %136 = sbr.rel (%p134) target = $region24
      $region23: #{refine_forward.3} parent=15 // pred_region
        %p137 = scmp.lt.s32.totalorder %s15, 1
        %s138 = scalar_select %p137, %s15, 1
        %s139 = smul.addr %s138, 16
        %s140 = smul.addr %s139, 8
        %s141 = scalar_lea.vmem %s1, %s140
      $region24: #{refine_forward.3} parent=15 // pred_fallthru
        _
    $region16: #{refine_forward.3} parent=5 // pred_fallthru
      _
    %p142 = scmp.le.s32.totalorder 1, %s8
    %p143 = scmp.lt.s32.totalorder %s8, 3
    %p144 = pnand %p142, %p143
    %p145 = pneg %p144
    // Predicated region
    $region25: #{refine_forward.3} parent=5 // pred_check
      _
    $region26: #{refine_forward.3} parent=5 // pred_check_branch
      %147 = sbr.rel (%p144) target = $region28
    $region27: #{refine_forward.3} parent=5 // pred_region
      %s148 = ssub.s32 %s8, 1
      %s149 = smul.u32 8, %s18
      %p150 = scmp.lt.s32.totalorder %s17, 1
      %s151 = scalar_select %p150, %s17, 1
      %p152 = scmp.lt.s32.totalorder %s149, 7
      %s153 = scalar_select %p152, %s149, 7
      %s154 = smul.addr %s151, 128
      %s155 = sadd.s32 %s153, %s154
      %s156 = smul.addr %s155, 8
      %s157 = scalar_lea.vmem %s0, %s156
      %p158 = pneg %p48
      %p159 = pneg %p45
      %p160 = scmp.lt.s32.totalorder %s17, 1
      %s161 = scalar_select %p160, %s17, 1
      %s162 = smul.addr %s161, 16
      %s163 = smul.addr %s162, 8
      %s164 = scalar_lea.vmem %s1, %s163
      %p165 = pneg %p74
      %p166 = pneg %p71
      %p167 = pneg %p102
      %p168 = pneg %p99
      %s169 = smul.u32 8, %s18
      %p170 = scmp.lt.s32.totalorder %s17, 1
      %s171 = scalar_select %p170, %s17, 1
      %p172 = scmp.lt.s32.totalorder %s169, 7
      %s173 = scalar_select %p172, %s169, 7
      %s174 = smul.addr %s171, 128
      %s175 = sadd.s32 %s173, %s174
      %s176 = smul.addr %s175, 8
      %s177 = scalar_lea.vmem %s2, %s176
      %s178 = smul.u32 8, %s18
      %p179 = scmp.lt.s32.totalorder %s17, 1
      %s180 = scalar_select %p179, %s17, 1
      %p181 = scmp.lt.s32.totalorder %s178, 7
      %s182 = scalar_select %p181, %s178, 7
      %s183 = smul.addr %s180, 128
      %s184 = sadd.s32 %s182, %s183
      %s185 = smul.addr %s184, 8
      %s186 = scalar_lea.vmem %s0, %s185
      %s187 = smul.u32 8, %s18
      %p188 = scmp.lt.s32.totalorder %s17, 1
      %s189 = scalar_select %p188, %s17, 1
      %s190 = smul.addr %s189, 16
      %s191 = smul.addr %s190, 8
      %s192 = scalar_lea.vmem %s1, %s191
      %s193 = smul.u32 8, %s18
      %p194 = scmp.lt.s32.totalorder %s17, 1
      %s195 = scalar_select %p194, %s17, 1
      %p196 = scmp.lt.s32.totalorder %s193, 7
      %s197 = scalar_select %p196, %s193, 7
      %s198 = smul.addr %s195, 128
      %s199 = sadd.s32 %s197, %s198
      %s200 = smul.addr %s199, 8
      %s201 = scalar_lea.vmem %s2, %s200
      %s202 = smul.u32 8, %s18
      %v203 = vld [vmem:[%s186] sm:$0xff]
      %v204 = vld [vmem:[%s186 + $0x8] sm:$0xff]
      %v205 = vld [vmem:[%s186 + $0x10] sm:$0xff]
      %v206 = vld [vmem:[%s186 + $0x18] sm:$0xff]
      %v207 = vld [vmem:[%s186 + $0x20] sm:$0xff]
      %v208 = vld [vmem:[%s186 + $0x28] sm:$0xff]
      %v209 = vld [vmem:[%s186 + $0x30] sm:$0xff]
      %v210 = vld [vmem:[%s186 + $0x38] sm:$0xff]
      %v211 = vld [vmem:[%s186 + $0x40] sm:$0xff]
      %v212 = vld [vmem:[%s186 + $0x48] sm:$0xff]
      %v213 = vld [vmem:[%s186 + $0x50] sm:$0xff]
      %v214 = vld [vmem:[%s186 + $0x58] sm:$0xff]
      %v215 = vld [vmem:[%s186 + $0x60] sm:$0xff]
      %v216 = vld [vmem:[%s186 + $0x68] sm:$0xff]
      %v217 = vld [vmem:[%s186 + $0x70] sm:$0xff]
      %v218 = vld [vmem:[%s186 + $0x78] sm:$0xff]
      %v219 = vld [vmem:[%s186 + $0x80] sm:$0xff]
      %v220 = vld [vmem:[%s186 + $0x88] sm:$0xff]
      %v221 = vld [vmem:[%s186 + $0x90] sm:$0xff]
      %v222 = vld [vmem:[%s186 + $0x98] sm:$0xff]
      %v223 = vld [vmem:[%s186 + $0xa0] sm:$0xff]
      %v224 = vld [vmem:[%s186 + $0xa8] sm:$0xff]
      %v225 = vld [vmem:[%s186 + $0xb0] sm:$0xff]
      %v226 = vld [vmem:[%s186 + $0xb8] sm:$0xff]
      %v227 = vld [vmem:[%s186 + $0xc0] sm:$0xff]
      %v228 = vld [vmem:[%s186 + $0xc8] sm:$0xff]
      %v229 = vld [vmem:[%s186 + $0xd0] sm:$0xff]
      %v230 = vld [vmem:[%s186 + $0xd8] sm:$0xff]
      %v231 = vld [vmem:[%s186 + $0xe0] sm:$0xff]
      %v232 = vld [vmem:[%s186 + $0xe8] sm:$0xff]
      %v233 = vld [vmem:[%s186 + $0xf0] sm:$0xff]
      %v234 = vld [vmem:[%s186 + $0xf8] sm:$0xff]
      %v235 = vld [vmem:[%s186 + $0x100] sm:$0xff]
      %v236 = vld [vmem:[%s186 + $0x108] sm:$0xff]
      %v237 = vld [vmem:[%s186 + $0x110] sm:$0xff]
      %v238 = vld [vmem:[%s186 + $0x118] sm:$0xff]
      %v239 = vld [vmem:[%s186 + $0x120] sm:$0xff]
      %v240 = vld [vmem:[%s186 + $0x128] sm:$0xff]
      %v241 = vld [vmem:[%s186 + $0x130] sm:$0xff]
      %v242 = vld [vmem:[%s186 + $0x138] sm:$0xff]
      %v243 = vld [vmem:[%s186 + $0x140] sm:$0xff]
      %v244 = vld [vmem:[%s186 + $0x148] sm:$0xff]
      %v245 = vld [vmem:[%s186 + $0x150] sm:$0xff]
      %v246 = vld [vmem:[%s186 + $0x158] sm:$0xff]
      %v247 = vld [vmem:[%s186 + $0x160] sm:$0xff]
      %v248 = vld [vmem:[%s186 + $0x168] sm:$0xff]
      %v249 = vld [vmem:[%s186 + $0x170] sm:$0xff]
      %v250 = vld [vmem:[%s186 + $0x178] sm:$0xff]
      %v251 = vld [vmem:[%s186 + $0x180] sm:$0xff]
      %v252 = vld [vmem:[%s186 + $0x188] sm:$0xff]
      %v253 = vld [vmem:[%s186 + $0x190] sm:$0xff]
      %v254 = vld [vmem:[%s186 + $0x198] sm:$0xff]
      %v255 = vld [vmem:[%s186 + $0x1a0] sm:$0xff]
      %v256 = vld [vmem:[%s186 + $0x1a8] sm:$0xff]
      %v257 = vld [vmem:[%s186 + $0x1b0] sm:$0xff]
      %v258 = vld [vmem:[%s186 + $0x1b8] sm:$0xff]
      %v259 = vld [vmem:[%s186 + $0x1c0] sm:$0xff]
      %v260 = vld [vmem:[%s186 + $0x1c8] sm:$0xff]
      %v261 = vld [vmem:[%s186 + $0x1d0] sm:$0xff]
      %v262 = vld [vmem:[%s186 + $0x1d8] sm:$0xff]
      %v263 = vld [vmem:[%s186 + $0x1e0] sm:$0xff]
      %v264 = vld [vmem:[%s186 + $0x1e8] sm:$0xff]
      %v265 = vld [vmem:[%s186 + $0x1f0] sm:$0xff]
      %v266 = vld [vmem:[%s186 + $0x1f8] sm:$0xff]
      %v267 = vld [vmem:[%s186 + $0x200] sm:$0xff]
      %v268 = vld [vmem:[%s186 + $0x208] sm:$0xff]
      %v269 = vld [vmem:[%s186 + $0x210] sm:$0xff]
      %v270 = vld [vmem:[%s186 + $0x218] sm:$0xff]
      %v271 = vld [vmem:[%s186 + $0x220] sm:$0xff]
      %v272 = vld [vmem:[%s186 + $0x228] sm:$0xff]
      %v273 = vld [vmem:[%s186 + $0x230] sm:$0xff]
      %v274 = vld [vmem:[%s186 + $0x238] sm:$0xff]
      %v275 = vld [vmem:[%s186 + $0x240] sm:$0xff]
      %v276 = vld [vmem:[%s186 + $0x248] sm:$0xff]
      %v277 = vld [vmem:[%s186 + $0x250] sm:$0xff]
      %v278 = vld [vmem:[%s186 + $0x258] sm:$0xff]
      %v279 = vld [vmem:[%s186 + $0x260] sm:$0xff]
      %v280 = vld [vmem:[%s186 + $0x268] sm:$0xff]
      %v281 = vld [vmem:[%s186 + $0x270] sm:$0xff]
      %v282 = vld [vmem:[%s186 + $0x278] sm:$0xff]
      %v283 = vld [vmem:[%s186 + $0x280] sm:$0xff]
      %v284 = vld [vmem:[%s186 + $0x288] sm:$0xff]
      %v285 = vld [vmem:[%s186 + $0x290] sm:$0xff]
      %v286 = vld [vmem:[%s186 + $0x298] sm:$0xff]
      %v287 = vld [vmem:[%s186 + $0x2a0] sm:$0xff]
      %v288 = vld [vmem:[%s186 + $0x2a8] sm:$0xff]
      %v289 = vld [vmem:[%s186 + $0x2b0] sm:$0xff]
      %v290 = vld [vmem:[%s186 + $0x2b8] sm:$0xff]
      %v291 = vld [vmem:[%s186 + $0x2c0] sm:$0xff]
      %v292 = vld [vmem:[%s186 + $0x2c8] sm:$0xff]
      %v293 = vld [vmem:[%s186 + $0x2d0] sm:$0xff]
      %v294 = vld [vmem:[%s186 + $0x2d8] sm:$0xff]
      %v295 = vld [vmem:[%s186 + $0x2e0] sm:$0xff]
      %v296 = vld [vmem:[%s186 + $0x2e8] sm:$0xff]
      %v297 = vld [vmem:[%s186 + $0x2f0] sm:$0xff]
      %v298 = vld [vmem:[%s186 + $0x2f8] sm:$0xff]
      %v299 = vld [vmem:[%s186 + $0x300] sm:$0xff]
      %v300 = vld [vmem:[%s186 + $0x308] sm:$0xff]
      %v301 = vld [vmem:[%s186 + $0x310] sm:$0xff]
      %v302 = vld [vmem:[%s186 + $0x318] sm:$0xff]
      %v303 = vld [vmem:[%s186 + $0x320] sm:$0xff]
      %v304 = vld [vmem:[%s186 + $0x328] sm:$0xff]
      %v305 = vld [vmem:[%s186 + $0x330] sm:$0xff]
      %v306 = vld [vmem:[%s186 + $0x338] sm:$0xff]
      %v307 = vld [vmem:[%s186 + $0x340] sm:$0xff]
      %v308 = vld [vmem:[%s186 + $0x348] sm:$0xff]
      %v309 = vld [vmem:[%s186 + $0x350] sm:$0xff]
      %v310 = vld [vmem:[%s186 + $0x358] sm:$0xff]
      %v311 = vld [vmem:[%s186 + $0x360] sm:$0xff]
      %v312 = vld [vmem:[%s186 + $0x368] sm:$0xff]
      %v313 = vld [vmem:[%s186 + $0x370] sm:$0xff]
      %v314 = vld [vmem:[%s186 + $0x378] sm:$0xff]
      %v315 = vld [vmem:[%s186 + $0x380] sm:$0xff]
      %v316 = vld [vmem:[%s186 + $0x388] sm:$0xff]
      %v317 = vld [vmem:[%s186 + $0x390] sm:$0xff]
      %v318 = vld [vmem:[%s186 + $0x398] sm:$0xff]
      %v319 = vld [vmem:[%s186 + $0x3a0] sm:$0xff]
      %v320 = vld [vmem:[%s186 + $0x3a8] sm:$0xff]
      %v321 = vld [vmem:[%s186 + $0x3b0] sm:$0xff]
      %v322 = vld [vmem:[%s186 + $0x3b8] sm:$0xff]
      %v323 = vld [vmem:[%s186 + $0x3c0] sm:$0xff]
      %v324 = vld [vmem:[%s186 + $0x3c8] sm:$0xff]
      %v325 = vld [vmem:[%s186 + $0x3d0] sm:$0xff]
      %v326 = vld [vmem:[%s186 + $0x3d8] sm:$0xff]
      %v327 = vld [vmem:[%s186 + $0x3e0] sm:$0xff]
      %v328 = vld [vmem:[%s186 + $0x3e8] sm:$0xff]
      %v329 = vld [vmem:[%s186 + $0x3f0] sm:$0xff]
      %v330 = vld [vmem:[%s186 + $0x3f8] sm:$0xff]
      %v331 = vld [vmem:[%s192] sm:$0xff]
      %v332 = vld [vmem:[%s192 + $0x8] sm:$0xff]
      %v333 = vld [vmem:[%s192 + $0x10] sm:$0xff]
      %v334 = vld [vmem:[%s192 + $0x18] sm:$0xff]
      %v335 = vld [vmem:[%s192 + $0x20] sm:$0xff]
      %v336 = vld [vmem:[%s192 + $0x28] sm:$0xff]
      %v337 = vld [vmem:[%s192 + $0x30] sm:$0xff]
      %v338 = vld [vmem:[%s192 + $0x38] sm:$0xff]
      %v339 = vld [vmem:[%s192 + $0x40] sm:$0xff]
      %v340 = vld [vmem:[%s192 + $0x48] sm:$0xff]
      %v341 = vld [vmem:[%s192 + $0x50] sm:$0xff]
      %v342 = vld [vmem:[%s192 + $0x58] sm:$0xff]
      %v343 = vld [vmem:[%s192 + $0x60] sm:$0xff]
      %v344 = vld [vmem:[%s192 + $0x68] sm:$0xff]
      %v345 = vld [vmem:[%s192 + $0x70] sm:$0xff]
      %v346 = vld [vmem:[%s192 + $0x78] sm:$0xff]
      %348 = vset.pattern.permute.xlu0 0
      %349 = vperm.xlu0 %348, %v331
      %v350 = vpop.permute.xlu0 %349
      %353 = vset.pattern.permute.xlu0 0
      %354 = vperm.xlu0 %353, %v332
      %v355 = vpop.permute.xlu0 %354
      %358 = vset.pattern.permute.xlu0 0
      %359 = vperm.xlu0 %358, %v333
      %v360 = vpop.permute.xlu0 %359
      %363 = vset.pattern.permute.xlu0 0
      %364 = vperm.xlu0 %363, %v334
      %v365 = vpop.permute.xlu0 %364
      %368 = vset.pattern.permute.xlu0 0
      %369 = vperm.xlu0 %368, %v335
      %v370 = vpop.permute.xlu0 %369
      %373 = vset.pattern.permute.xlu0 0
      %374 = vperm.xlu0 %373, %v336
      %v375 = vpop.permute.xlu0 %374
      %378 = vset.pattern.permute.xlu0 0
      %379 = vperm.xlu0 %378, %v337
      %v380 = vpop.permute.xlu0 %379
      %383 = vset.pattern.permute.xlu0 0
      %384 = vperm.xlu0 %383, %v338
      %v385 = vpop.permute.xlu0 %384
      %388 = vset.pattern.permute.xlu0 0
      %389 = vperm.xlu0 %388, %v339
      %v390 = vpop.permute.xlu0 %389
      %393 = vset.pattern.permute.xlu0 0
      %394 = vperm.xlu0 %393, %v340
      %v395 = vpop.permute.xlu0 %394
      %398 = vset.pattern.permute.xlu0 0
      %399 = vperm.xlu0 %398, %v341
      %v400 = vpop.permute.xlu0 %399
      %403 = vset.pattern.permute.xlu0 0
      %404 = vperm.xlu0 %403, %v342
      %v405 = vpop.permute.xlu0 %404
      %408 = vset.pattern.permute.xlu0 0
      %409 = vperm.xlu0 %408, %v343
      %v410 = vpop.permute.xlu0 %409
      %413 = vset.pattern.permute.xlu0 0
      %414 = vperm.xlu0 %413, %v344
      %v415 = vpop.permute.xlu0 %414
      %418 = vset.pattern.permute.xlu0 0
      %419 = vperm.xlu0 %418, %v345
      %v420 = vpop.permute.xlu0 %419
      %423 = vset.pattern.permute.xlu0 0
      %424 = vperm.xlu0 %423, %v346
      %v425 = vpop.permute.xlu0 %424
      %v427 = vmul.f32 %v203, %v350
      %v428 = vmul.f32 %v204, %v350
      %v429 = vmul.f32 %v205, %v350
      %v430 = vmul.f32 %v206, %v350
      %v431 = vmul.f32 %v207, %v350
      %v432 = vmul.f32 %v208, %v350
      %v433 = vmul.f32 %v209, %v350
      %v434 = vmul.f32 %v210, %v350
      %v435 = vmul.f32 %v211, %v355
      %v436 = vmul.f32 %v212, %v355
      %v437 = vmul.f32 %v213, %v355
      %v438 = vmul.f32 %v214, %v355
      %v439 = vmul.f32 %v215, %v355
      %v440 = vmul.f32 %v216, %v355
      %v441 = vmul.f32 %v217, %v355
      %v442 = vmul.f32 %v218, %v355
      %v443 = vmul.f32 %v219, %v360
      %v444 = vmul.f32 %v220, %v360
      %v445 = vmul.f32 %v221, %v360
      %v446 = vmul.f32 %v222, %v360
      %v447 = vmul.f32 %v223, %v360
      %v448 = vmul.f32 %v224, %v360
      %v449 = vmul.f32 %v225, %v360
      %v450 = vmul.f32 %v226, %v360
      %v451 = vmul.f32 %v227, %v365
      %v452 = vmul.f32 %v228, %v365
      %v453 = vmul.f32 %v229, %v365
      %v454 = vmul.f32 %v230, %v365
      %v455 = vmul.f32 %v231, %v365
      %v456 = vmul.f32 %v232, %v365
      %v457 = vmul.f32 %v233, %v365
      %v458 = vmul.f32 %v234, %v365
      %v459 = vmul.f32 %v235, %v370
      %v460 = vmul.f32 %v236, %v370
      %v461 = vmul.f32 %v237, %v370
      %v462 = vmul.f32 %v238, %v370
      %v463 = vmul.f32 %v239, %v370
      %v464 = vmul.f32 %v240, %v370
      %v465 = vmul.f32 %v241, %v370
      %v466 = vmul.f32 %v242, %v370
      %v467 = vmul.f32 %v243, %v375
      %v468 = vmul.f32 %v244, %v375
      %v469 = vmul.f32 %v245, %v375
      %v470 = vmul.f32 %v246, %v375
      %v471 = vmul.f32 %v247, %v375
      %v472 = vmul.f32 %v248, %v375
      %v473 = vmul.f32 %v249, %v375
      %v474 = vmul.f32 %v250, %v375
      %v475 = vmul.f32 %v251, %v380
      %v476 = vmul.f32 %v252, %v380
      %v477 = vmul.f32 %v253, %v380
      %v478 = vmul.f32 %v254, %v380
      %v479 = vmul.f32 %v255, %v380
      %v480 = vmul.f32 %v256, %v380
      %v481 = vmul.f32 %v257, %v380
      %v482 = vmul.f32 %v258, %v380
      %v483 = vmul.f32 %v259, %v385
      %v484 = vmul.f32 %v260, %v385
      %v485 = vmul.f32 %v261, %v385
      %v486 = vmul.f32 %v262, %v385
      %v487 = vmul.f32 %v263, %v385
      %v488 = vmul.f32 %v264, %v385
      %v489 = vmul.f32 %v265, %v385
      %v490 = vmul.f32 %v266, %v385
      %v491 = vmul.f32 %v267, %v390
      %v492 = vmul.f32 %v268, %v390
      %v493 = vmul.f32 %v269, %v390
      %v494 = vmul.f32 %v270, %v390
      %v495 = vmul.f32 %v271, %v390
      %v496 = vmul.f32 %v272, %v390
      %v497 = vmul.f32 %v273, %v390
      %v498 = vmul.f32 %v274, %v390
      %v499 = vmul.f32 %v275, %v395
      %v500 = vmul.f32 %v276, %v395
      %v501 = vmul.f32 %v277, %v395
      %v502 = vmul.f32 %v278, %v395
      %v503 = vmul.f32 %v279, %v395
      %v504 = vmul.f32 %v280, %v395
      %v505 = vmul.f32 %v281, %v395
      %v506 = vmul.f32 %v282, %v395
      %v507 = vmul.f32 %v283, %v400
      %v508 = vmul.f32 %v284, %v400
      %v509 = vmul.f32 %v285, %v400
      %v510 = vmul.f32 %v286, %v400
      %v511 = vmul.f32 %v287, %v400
      %v512 = vmul.f32 %v288, %v400
      %v513 = vmul.f32 %v289, %v400
      %v514 = vmul.f32 %v290, %v400
      %v515 = vmul.f32 %v291, %v405
      %v516 = vmul.f32 %v292, %v405
      %v517 = vmul.f32 %v293, %v405
      %v518 = vmul.f32 %v294, %v405
      %v519 = vmul.f32 %v295, %v405
      %v520 = vmul.f32 %v296, %v405
      %v521 = vmul.f32 %v297, %v405
      %v522 = vmul.f32 %v298, %v405
      %v523 = vmul.f32 %v299, %v410
      %v524 = vmul.f32 %v300, %v410
      %v525 = vmul.f32 %v301, %v410
      %v526 = vmul.f32 %v302, %v410
      %v527 = vmul.f32 %v303, %v410
      %v528 = vmul.f32 %v304, %v410
      %v529 = vmul.f32 %v305, %v410
      %v530 = vmul.f32 %v306, %v410
      %v531 = vmul.f32 %v307, %v415
      %v532 = vmul.f32 %v308, %v415
      %v533 = vmul.f32 %v309, %v415
      %v534 = vmul.f32 %v310, %v415
      %v535 = vmul.f32 %v311, %v415
      %v536 = vmul.f32 %v312, %v415
      %v537 = vmul.f32 %v313, %v415
      %v538 = vmul.f32 %v314, %v415
      %v539 = vmul.f32 %v315, %v420
      %v540 = vmul.f32 %v316, %v420
      %v541 = vmul.f32 %v317, %v420
      %v542 = vmul.f32 %v318, %v420
      %v543 = vmul.f32 %v319, %v420
      %v544 = vmul.f32 %v320, %v420
      %v545 = vmul.f32 %v321, %v420
      %v546 = vmul.f32 %v322, %v420
      %v547 = vmul.f32 %v323, %v425
      %v548 = vmul.f32 %v324, %v425
      %v549 = vmul.f32 %v325, %v425
      %v550 = vmul.f32 %v326, %v425
      %v551 = vmul.f32 %v327, %v425
      %v552 = vmul.f32 %v328, %v425
      %v553 = vmul.f32 %v329, %v425
      %v554 = vmul.f32 %v330, %v425
      %555 = vst [vmem:[%s201] sm:$0xff] %v427
      %556 = vst [vmem:[%s201 + $0x8] sm:$0xff] %v428
      %557 = vst [vmem:[%s201 + $0x10] sm:$0xff] %v429
      %558 = vst [vmem:[%s201 + $0x18] sm:$0xff] %v430
      %559 = vst [vmem:[%s201 + $0x20] sm:$0xff] %v431
      %560 = vst [vmem:[%s201 + $0x28] sm:$0xff] %v432
      %561 = vst [vmem:[%s201 + $0x30] sm:$0xff] %v433
      %562 = vst [vmem:[%s201 + $0x38] sm:$0xff] %v434
      %563 = vst [vmem:[%s201 + $0x40] sm:$0xff] %v435
      %564 = vst [vmem:[%s201 + $0x48] sm:$0xff] %v436
      %565 = vst [vmem:[%s201 + $0x50] sm:$0xff] %v437
      %566 = vst [vmem:[%s201 + $0x58] sm:$0xff] %v438
      %567 = vst [vmem:[%s201 + $0x60] sm:$0xff] %v439
      %568 = vst [vmem:[%s201 + $0x68] sm:$0xff] %v440
      %569 = vst [vmem:[%s201 + $0x70] sm:$0xff] %v441
      %570 = vst [vmem:[%s201 + $0x78] sm:$0xff] %v442
      %571 = vst [vmem:[%s201 + $0x80] sm:$0xff] %v443
      %572 = vst [vmem:[%s201 + $0x88] sm:$0xff] %v444
      %573 = vst [vmem:[%s201 + $0x90] sm:$0xff] %v445
      %574 = vst [vmem:[%s201 + $0x98] sm:$0xff] %v446
      %575 = vst [vmem:[%s201 + $0xa0] sm:$0xff] %v447
      %576 = vst [vmem:[%s201 + $0xa8] sm:$0xff] %v448
      %577 = vst [vmem:[%s201 + $0xb0] sm:$0xff] %v449
      %578 = vst [vmem:[%s201 + $0xb8] sm:$0xff] %v450
      %579 = vst [vmem:[%s201 + $0xc0] sm:$0xff] %v451
      %580 = vst [vmem:[%s201 + $0xc8] sm:$0xff] %v452
      %581 = vst [vmem:[%s201 + $0xd0] sm:$0xff] %v453
      %582 = vst [vmem:[%s201 + $0xd8] sm:$0xff] %v454
      %583 = vst [vmem:[%s201 + $0xe0] sm:$0xff] %v455
      %584 = vst [vmem:[%s201 + $0xe8] sm:$0xff] %v456
      %585 = vst [vmem:[%s201 + $0xf0] sm:$0xff] %v457
      %586 = vst [vmem:[%s201 + $0xf8] sm:$0xff] %v458
      %587 = vst [vmem:[%s201 + $0x100] sm:$0xff] %v459
      %588 = vst [vmem:[%s201 + $0x108] sm:$0xff] %v460
      %589 = vst [vmem:[%s201 + $0x110] sm:$0xff] %v461
      %590 = vst [vmem:[%s201 + $0x118] sm:$0xff] %v462
      %591 = vst [vmem:[%s201 + $0x120] sm:$0xff] %v463
      %592 = vst [vmem:[%s201 + $0x128] sm:$0xff] %v464
      %593 = vst [vmem:[%s201 + $0x130] sm:$0xff] %v465
      %594 = vst [vmem:[%s201 + $0x138] sm:$0xff] %v466
      %595 = vst [vmem:[%s201 + $0x140] sm:$0xff] %v467
      %596 = vst [vmem:[%s201 + $0x148] sm:$0xff] %v468
      %597 = vst [vmem:[%s201 + $0x150] sm:$0xff] %v469
      %598 = vst [vmem:[%s201 + $0x158] sm:$0xff] %v470
      %599 = vst [vmem:[%s201 + $0x160] sm:$0xff] %v471
      %600 = vst [vmem:[%s201 + $0x168] sm:$0xff] %v472
      %601 = vst [vmem:[%s201 + $0x170] sm:$0xff] %v473
      %602 = vst [vmem:[%s201 + $0x178] sm:$0xff] %v474
      %603 = vst [vmem:[%s201 + $0x180] sm:$0xff] %v475
      %604 = vst [vmem:[%s201 + $0x188] sm:$0xff] %v476
      %605 = vst [vmem:[%s201 + $0x190] sm:$0xff] %v477
      %606 = vst [vmem:[%s201 + $0x198] sm:$0xff] %v478
      %607 = vst [vmem:[%s201 + $0x1a0] sm:$0xff] %v479
      %608 = vst [vmem:[%s201 + $0x1a8] sm:$0xff] %v480
      %609 = vst [vmem:[%s201 + $0x1b0] sm:$0xff] %v481
      %610 = vst [vmem:[%s201 + $0x1b8] sm:$0xff] %v482
      %611 = vst [vmem:[%s201 + $0x1c0] sm:$0xff] %v483
      %612 = vst [vmem:[%s201 + $0x1c8] sm:$0xff] %v484
      %613 = vst [vmem:[%s201 + $0x1d0] sm:$0xff] %v485
      %614 = vst [vmem:[%s201 + $0x1d8] sm:$0xff] %v486
      %615 = vst [vmem:[%s201 + $0x1e0] sm:$0xff] %v487
      %616 = vst [vmem:[%s201 + $0x1e8] sm:$0xff] %v488
      %617 = vst [vmem:[%s201 + $0x1f0] sm:$0xff] %v489
      %618 = vst [vmem:[%s201 + $0x1f8] sm:$0xff] %v490
      %619 = vst [vmem:[%s201 + $0x200] sm:$0xff] %v491
      %620 = vst [vmem:[%s201 + $0x208] sm:$0xff] %v492
      %621 = vst [vmem:[%s201 + $0x210] sm:$0xff] %v493
      %622 = vst [vmem:[%s201 + $0x218] sm:$0xff] %v494
      %623 = vst [vmem:[%s201 + $0x220] sm:$0xff] %v495
      %624 = vst [vmem:[%s201 + $0x228] sm:$0xff] %v496
      %625 = vst [vmem:[%s201 + $0x230] sm:$0xff] %v497
      %626 = vst [vmem:[%s201 + $0x238] sm:$0xff] %v498
      %627 = vst [vmem:[%s201 + $0x240] sm:$0xff] %v499
      %628 = vst [vmem:[%s201 + $0x248] sm:$0xff] %v500
      %629 = vst [vmem:[%s201 + $0x250] sm:$0xff] %v501
      %630 = vst [vmem:[%s201 + $0x258] sm:$0xff] %v502
      %631 = vst [vmem:[%s201 + $0x260] sm:$0xff] %v503
      %632 = vst [vmem:[%s201 + $0x268] sm:$0xff] %v504
      %633 = vst [vmem:[%s201 + $0x270] sm:$0xff] %v505
      %634 = vst [vmem:[%s201 + $0x278] sm:$0xff] %v506
      %635 = vst [vmem:[%s201 + $0x280] sm:$0xff] %v507
      %636 = vst [vmem:[%s201 + $0x288] sm:$0xff] %v508
      %637 = vst [vmem:[%s201 + $0x290] sm:$0xff] %v509
      %638 = vst [vmem:[%s201 + $0x298] sm:$0xff] %v510
      %639 = vst [vmem:[%s201 + $0x2a0] sm:$0xff] %v511
      %640 = vst [vmem:[%s201 + $0x2a8] sm:$0xff] %v512
      %641 = vst [vmem:[%s201 + $0x2b0] sm:$0xff] %v513
      %642 = vst [vmem:[%s201 + $0x2b8] sm:$0xff] %v514
      %643 = vst [vmem:[%s201 + $0x2c0] sm:$0xff] %v515
      %644 = vst [vmem:[%s201 + $0x2c8] sm:$0xff] %v516
      %645 = vst [vmem:[%s201 + $0x2d0] sm:$0xff] %v517
      %646 = vst [vmem:[%s201 + $0x2d8] sm:$0xff] %v518
      %647 = vst [vmem:[%s201 + $0x2e0] sm:$0xff] %v519
      %648 = vst [vmem:[%s201 + $0x2e8] sm:$0xff] %v520
      %649 = vst [vmem:[%s201 + $0x2f0] sm:$0xff] %v521
      %650 = vst [vmem:[%s201 + $0x2f8] sm:$0xff] %v522
      %651 = vst [vmem:[%s201 + $0x300] sm:$0xff] %v523
      %652 = vst [vmem:[%s201 + $0x308] sm:$0xff] %v524
      %653 = vst [vmem:[%s201 + $0x310] sm:$0xff] %v525
      %654 = vst [vmem:[%s201 + $0x318] sm:$0xff] %v526
      %655 = vst [vmem:[%s201 + $0x320] sm:$0xff] %v527
      %656 = vst [vmem:[%s201 + $0x328] sm:$0xff] %v528
      %657 = vst [vmem:[%s201 + $0x330] sm:$0xff] %v529
      %658 = vst [vmem:[%s201 + $0x338] sm:$0xff] %v530
      %659 = vst [vmem:[%s201 + $0x340] sm:$0xff] %v531
      %660 = vst [vmem:[%s201 + $0x348] sm:$0xff] %v532
      %661 = vst [vmem:[%s201 + $0x350] sm:$0xff] %v533
      %662 = vst [vmem:[%s201 + $0x358] sm:$0xff] %v534
      %663 = vst [vmem:[%s201 + $0x360] sm:$0xff] %v535
      %664 = vst [vmem:[%s201 + $0x368] sm:$0xff] %v536
      %665 = vst [vmem:[%s201 + $0x370] sm:$0xff] %v537
      %666 = vst [vmem:[%s201 + $0x378] sm:$0xff] %v538
      %667 = vst [vmem:[%s201 + $0x380] sm:$0xff] %v539
      %668 = vst [vmem:[%s201 + $0x388] sm:$0xff] %v540
      %669 = vst [vmem:[%s201 + $0x390] sm:$0xff] %v541
      %670 = vst [vmem:[%s201 + $0x398] sm:$0xff] %v542
      %671 = vst [vmem:[%s201 + $0x3a0] sm:$0xff] %v543
      %672 = vst [vmem:[%s201 + $0x3a8] sm:$0xff] %v544
      %673 = vst [vmem:[%s201 + $0x3b0] sm:$0xff] %v545
      %674 = vst [vmem:[%s201 + $0x3b8] sm:$0xff] %v546
      %675 = vst [vmem:[%s201 + $0x3c0] sm:$0xff] %v547
      %676 = vst [vmem:[%s201 + $0x3c8] sm:$0xff] %v548
      %677 = vst [vmem:[%s201 + $0x3d0] sm:$0xff] %v549
      %678 = vst [vmem:[%s201 + $0x3d8] sm:$0xff] %v550
      %679 = vst [vmem:[%s201 + $0x3e0] sm:$0xff] %v551
      %680 = vst [vmem:[%s201 + $0x3e8] sm:$0xff] %v552
      %681 = vst [vmem:[%s201 + $0x3f0] sm:$0xff] %v553
      %682 = vst [vmem:[%s201 + $0x3f8] sm:$0xff] %v554
      %s683 = smul.u32 8, %s18
      %p684 = scmp.lt.s32.totalorder %s17, 1
      %s685 = scalar_select %p684, %s17, 1
      %p686 = scmp.lt.s32.totalorder %s683, 7
      %s687 = scalar_select %p686, %s683, 7
      %s688 = smul.addr %s685, 128
      %s689 = sadd.s32 %s687, %s688
      %s690 = smul.addr %s689, 8
      %s691 = scalar_lea.vmem %s2, %s690
      // Predicated region
      $region29: #{refine_forward.3} parent=27 // pred_check
        %p692 = pneg %p99
      $region30: #{refine_forward.3} parent=27 // pred_check_branch
        %694 = sbr.rel (%p692) target = $region32
      $region31: #{refine_forward.3} parent=27 // pred_region
        %s695 = smul.u32 8, %s18
      $region32: #{refine_forward.3} parent=27 // pred_fallthru
        _
    $region28: #{refine_forward.3} parent=5 // pred_fallthru
      _
    %p696 = scmp.le.s32.totalorder 2, %s8
    // Predicated region
    $region33: #{refine_forward.3} parent=5 // pred_check
      %p697 = pneg %p696
    $region34: #{refine_forward.3} parent=5 // pred_check_branch
      %699 = sbr.rel (%p697) target = $region36
    $region35: #{refine_forward.3} parent=5 // pred_region
      %s700 = ssub.s32 %s8, 2
      // Predicated region
      $region37: #{refine_forward.3} parent=35 // pred_check
        %p701 = pneg %p105
      $region38: #{refine_forward.3} parent=35 // pred_check_branch
        %703 = sbr.rel (%p701) target = $region40
      $region39: #{refine_forward.3} parent=35 // pred_region
        %s704 = smul.u32 8, %s20
        %p705 = scmp.lt.s32.totalorder %s19, 1
        %s706 = scalar_select %p705, %s19, 1
        %p707 = scmp.lt.s32.totalorder %s704, 7
        %s708 = scalar_select %p707, %s704, 7
        %s709 = smul.addr %s706, 128
        %s710 = sadd.s32 %s708, %s709
        %s711 = smul.addr %s710, 8
        %s712 = scalar_lea.vmem %s2, %s711
      $region40: #{refine_forward.3} parent=35 // pred_fallthru
        _
    $region36: #{refine_forward.3} parent=5 // pred_fallthru
      _
  $region6: #{refine_forward.3} parent=0 // loop_footer
    %s12 = sadd.s32 1, %s8
  $region7: #{refine_forward.3} parent=0 // loop_footer_branch
    %7 = sbr.rel target = $region3
  $region8: #{refine_forward.3} parent=0 // loop_exit
    _

// kernel: refine_forward.2
$region0: #{refine_forward.2}
  #allocation0 [shape = 'u32[]', space=smem, size = 0x4, offset = 0x4, fixed_abs, tag = 'smem constant byte address 0x4 - core index']
  #allocation1 [shape = 'u32[144,128]{1,0:T(1,128)}', space=vmem, size = 0x12000, scoped, tag = 'internal scratch']
  %s0 = inlined_call_operand.vmem [shape: f32[2,8,8], index: 0, kind: input, shape index: {}]
  %s1 = inlined_call_operand.vmem [shape: f32[32,8], index: 1, kind: input, shape index: {}]
  %s2 = inlined_call_operand.vmem [shape: f32[8,32], index: 2, kind: input, shape index: {}]
  %s3 = inlined_call_operand.hbm [shape: f32[2,32,32], index: 3, kind: output, shape index: {}]
  %s4 = sld [smem:[#allocation0]]
  $region45: #{refine_forward.2} parent=0
    _
  %s6 = ssub.s32 1, %s4
  %s7 = scalar_select 0, %s6, %s4
  $region1: #{refine_forward.2} parent=0
    #allocation2 [shape = 'u8[32768]{0}', space=vmem, size = 0x8000, scoped, tag = 'output window, operand 0']
    #allocation3 [shape = 's32[2]{0}', space=sflag, size = 0x8, scoped, tag = 'scoped memory for refine_forward.2']
    %8 = vsyncpa [#allocation3], 0
    %s9 = scalar_lea.sflag [#allocation3], 1
    %10 = vsyncpa %s9, 0
    loop: start=0, step=1, limit=4
    $region2: #{refine_forward.2} parent=1 // loop_pre_header
      _
    $region3: #{refine_forward.2} parent=1 // loop_header
      %s12 = sphi 0, %s16
      %p13 = scmp.ge.s32.totalorder %s12, 4
      %s19 = sphi 0, %s31
      %s20 = sphi 0, %s27
      %s21 = sphi 0, %s19
      %s22 = sphi 0, %s20
      %s23 = sphi 0, %s21
      %s24 = sphi 0, %s22
      %s34 = sphi 0, %s36
      %s37 = sphi 0, %s34
      %s38 = sphi 0, %s37
      %s54 = sphi 0, %s38
      %s60 = sphi 0, %s62
      %s63 = sphi 0, %s60
      %s64 = sphi 0, %s63
      %s80 = sphi 0, %s64
      %s84 = sphi 0, %s84
      %s86 = sphi 0, %s84
      %s87 = sphi 0, %s86
      %s101 = sphi 0, %s87
      %s109 = sphi 0, %s111
      %s112 = sphi 0, %s109
      %s113 = sphi 0, %s112
      %s129 = sphi 0, %s113
    $region4: #{refine_forward.2} parent=1 // loop_header_branch
      %15 = sbr.rel (%p13) target = $region8
    $region5: #{refine_forward.2} parent=1 // loop_body
      %s17 = ssub.s32 %s12, 1
      %s18 = ssub.s32 %s12, 2
      %s25 = sadd.s32 1, %s20
      %p26 = scmp.ge.s32.totalorder %s25, 1
      %s27 = scalar_select %p26, 0, %s25
      %s28 = sadd.s32 1, %s19
      %s29 = scalar_select %p26, %s28, %s19
      %p30 = scmp.ge.s32.totalorder %s29, 2
      %s31 = scalar_select %p30, 0, %s29
      %s32 = ssub.s32 %s19, %s31
      %p33 = scmp.eq.s32.totalorder %s32, 0
      %s35 = sadd.s32 %s34, 1
      %s36 = scalar_select %p33, %s34, %s35
      %p39 = pneg %p33
      %p40 = scmp.eq.s32.totalorder %s12, 1
      %p41 = por %p39, %p40
      %p42 = scmp.ne.s32.totalorder %s34, %s37
      %p43 = scmp.eq.s32.totalorder %s12, 0
      %p44 = por %p42, %p43
      %p45 = scmp.ne.s32.totalorder %s34, %s37
      %p46 = scmp.eq.s32.totalorder %s17, 1
      %p47 = por %p45, %p46
      %p48 = scmp.ne.s32.totalorder %s37, %s38
      %p49 = scmp.eq.s32.totalorder %s17, 0
      %p50 = por %p48, %p49
      %p51 = scmp.ne.s32.totalorder %s37, %s38
      %p52 = scmp.eq.s32.totalorder %s18, 1
      %p53 = por %p51, %p52
      %p55 = scmp.ne.s32.totalorder %s38, %s54
      %p56 = scmp.eq.s32.totalorder %s18, 0
      %p57 = por %p55, %p56
      %s58 = ssub.s32 %s20, %s27
      %p59 = scmp.eq.s32.totalorder %s58, 0
      %s61 = sadd.s32 %s60, 1
      %s62 = scalar_select %p59, %s60, %s61
      %p65 = pneg %p59
      %p66 = scmp.eq.s32.totalorder %s12, 1
      %p67 = por %p65, %p66
      %p68 = scmp.ne.s32.totalorder %s60, %s63
      %p69 = scmp.eq.s32.totalorder %s12, 0
      %p70 = por %p68, %p69
      %p71 = scmp.ne.s32.totalorder %s60, %s63
      %p72 = scmp.eq.s32.totalorder %s17, 1
      %p73 = por %p71, %p72
      %p74 = scmp.ne.s32.totalorder %s63, %s64
      %p75 = scmp.eq.s32.totalorder %s17, 0
      %p76 = por %p74, %p75
      %p77 = scmp.ne.s32.totalorder %s63, %s64
      %p78 = scmp.eq.s32.totalorder %s18, 1
      %p79 = por %p77, %p78
      %p81 = scmp.ne.s32.totalorder %s64, %s80
      %p82 = scmp.eq.s32.totalorder %s18, 0
      %p83 = por %p81, %p82
      %s85 = sadd.s32 %s84, 1
      %p88 = scmp.eq.s32.totalorder %s12, 1
      %p89 = scmp.ne.s32.totalorder %s84, %s86
      %p90 = scmp.eq.s32.totalorder %s12, 0
      %p91 = por %p89, %p90
      %p92 = scmp.ne.s32.totalorder %s84, %s86
      %p93 = scmp.eq.s32.totalorder %s17, 1
      %p94 = por %p92, %p93
      %p95 = scmp.ne.s32.totalorder %s86, %s87
      %p96 = scmp.eq.s32.totalorder %s17, 0
      %p97 = por %p95, %p96
      %p98 = scmp.ne.s32.totalorder %s86, %s87
      %p99 = scmp.eq.s32.totalorder %s18, 1
      %p100 = por %p98, %p99
      %p102 = scmp.ne.s32.totalorder %s87, %s101
      %p103 = scmp.eq.s32.totalorder %s18, 0
      %p104 = por %p102, %p103
      %s105 = ssub.s32 %s19, %s31
      %s106 = ssub.s32 %s20, %s27
      %s107 = sor.u32 %s105, %s106
      %p108 = scmp.eq.s32.totalorder %s107, 0
      %s110 = sadd.s32 %s109, 1
      %s111 = scalar_select %p108, %s109, %s110
      %p114 = pneg %p108
      %p115 = scmp.eq.s32.totalorder %s12, 1
      %p116 = por %p114, %p115
      %p117 = scmp.ne.s32.totalorder %s109, %s112
      %p118 = scmp.eq.s32.totalorder %s12, 0
      %p119 = por %p117, %p118
      %p120 = scmp.ne.s32.totalorder %s109, %s112
      %p121 = scmp.eq.s32.totalorder %s17, 1
      %p122 = por %p120, %p121
      %p123 = scmp.ne.s32.totalorder %s112, %s113
      %p124 = scmp.eq.s32.totalorder %s17, 0
      %p125 = por %p123, %p124
      %p126 = scmp.ne.s32.totalorder %s112, %s113
      %p127 = scmp.eq.s32.totalorder %s18, 1
      %p128 = por %p126, %p127
      %p130 = scmp.ne.s32.totalorder %s113, %s129
      %p131 = scmp.eq.s32.totalorder %s18, 0
      %p132 = por %p130, %p131
      %p133 = scmp.le.s32.totalorder 1, %s12
      %p134 = scmp.lt.s32.totalorder %s12, 3
      %p135 = pnand %p133, %p134
      %p136 = pneg %p135
      // Predicated region
      $region9: #{refine_forward.2} parent=5 // pred_check
        _
      $region10: #{refine_forward.2} parent=5 // pred_check_branch
        %138 = sbr.rel (%p135) target = $region12
      $region11: #{refine_forward.2} parent=5 // pred_region
        %s139 = ssub.s32 %s12, 1
        // Predicated region
        $region13: #{refine_forward.2} parent=11 // pred_check
          %p140 = pneg %p76
        $region14: #{refine_forward.2} parent=11 // pred_check_branch
          %142 = sbr.rel (%p140) target = $region16
        $region15: #{refine_forward.2} parent=11 // pred_region
          %s143 = smul.u32 4, %s22
          %p144 = scmp.lt.s32.totalorder %s143, 3
          %s145 = scalar_select %p144, %s143, 3
          %s146 = smul.addr %s145, 8
          %s147 = scalar_lea.vmem %s1, %s146
          %s148 = smul.u32 4, %s22
        $region16: #{refine_forward.2} parent=11 // pred_fallthru
          _
        // Predicated region
        $region17: #{refine_forward.2} parent=11 // pred_check
          %p149 = pneg %p97
        $region18: #{refine_forward.2} parent=11 // pred_check_branch
          %151 = sbr.rel (%p149) target = $region20
        $region19: #{refine_forward.2} parent=11 // pred_region
          _
        $region20: #{refine_forward.2} parent=11 // pred_fallthru
          _
      $region12: #{refine_forward.2} parent=5 // pred_fallthru
        _
      %p152 = scmp.lt.s32.totalorder %s12, 2
      // Predicated region
      $region21: #{refine_forward.2} parent=5 // pred_check
        %p153 = pneg %p152
      $region22: #{refine_forward.2} parent=5 // pred_check_branch
        %155 = sbr.rel (%p153) target = $region24
      $region23: #{refine_forward.2} parent=5 // pred_region
        // Predicated region
        $region25: #{refine_forward.2} parent=23 // pred_check
          %p156 = pneg %p44
        $region26: #{refine_forward.2} parent=23 // pred_check_branch
          %158 = sbr.rel (%p156) target = $region28
        $region27: #{refine_forward.2} parent=23 // pred_region
          %p159 = scmp.lt.s32.totalorder %s19, 1
          %s160 = scalar_select %p159, %s19, 1
          %s161 = smul.addr %s160, 8
          %s162 = scalar_lea.vmem %s0, %s161
        $region28: #{refine_forward.2} parent=23 // pred_fallthru
          _
      $region24: #{refine_forward.2} parent=5 // pred_fallthru
        _
      %p163 = scmp.le.s32.totalorder 1, %s12
      %p164 = scmp.lt.s32.totalorder %s12, 3
      %p165 = pnand %p163, %p164
      %p166 = pneg %p165
      // Predicated region
      $region29: #{refine_forward.2} parent=5 // pred_check
        _
      $region30: #{refine_forward.2} parent=5 // pred_check_branch
        %168 = sbr.rel (%p165) target = $region32
      $region31: #{refine_forward.2} parent=5 // pred_region
        %s169 = ssub.s32 %s12, 1
        %p170 = scmp.lt.s32.totalorder %s21, 1
        %s171 = scalar_select %p170, %s21, 1
        %s172 = smul.addr %s171, 8
        %s173 = scalar_lea.vmem %s0, %s172
        %p174 = pneg %p50
        %p175 = pneg %p47
        %s176 = smul.u32 4, %s22
        %p177 = scmp.lt.s32.totalorder %s176, 3
        %s178 = scalar_select %p177, %s176, 3
        %s179 = smul.addr %s178, 8
        %s180 = scalar_lea.vmem %s1, %s179
        %p181 = pneg %p76
        %p182 = pneg %p73
        %p183 = pneg %p97
        %p184 = pneg %p94
        %p185 = pneg %p125
        %p186 = pneg %p122
        %s187 = sand.u32 %s112, 1
        %s188 = scalar_lea.sflag [#allocation3], %s187
        %s189 = sand.u32 %s112, 1
        %s190 = smul.addr %s189, 32
        %s191 = scalar_lea.vmem [#allocation2], %s190
        %p192 = scmp.lt.s32.totalorder %s21, 1
        %s193 = scalar_select %p192, %s21, 1
        %s194 = smul.addr %s193, 8
        %s195 = scalar_lea.vmem %s0, %s194
        %s196 = smul.u32 4, %s22
        %p197 = scmp.lt.s32.totalorder %s196, 3
        %s198 = scalar_select %p197, %s196, 3
        %s199 = smul.addr %s198, 8
        %s200 = scalar_lea.vmem %s1, %s199
        %s201 = smul.u32 4, %s22
        %s202 = smul.u32 4, %s22
        %v203 = vld [vmem:[%s195] sm:$0xff]
        %v204 = vld [vmem:[%s200] sm:$0xff]
        %v205 = vld [vmem:[%s200 + $0x8] sm:$0xff]
        %v206 = vld [vmem:[%s200 + $0x10] sm:$0xff]
        %v207 = vld [vmem:[%s200 + $0x18] sm:$0xff]
        %vm208 = vcmask 64512
        %v210 = vsel %vm208, %v204, 0
        %v213 = vsel %vm208, %v205, 0
        %v216 = vsel %vm208, %v206, 0
        %v219 = vsel %vm208, %v207, 0
        %221 = vmatprep.subr.mxu0 0.0
        %222 = vmatpush1.msra.mxu0 0.0
        %223 = vmatprep.subr.mxu0 0.0
        %224 = vmatpush1.msra.mxu0 0.0
        %225 = vmatprep.subr.mxu0 0.0
        %226 = vmatpush1.msra.mxu0 0.0
        %227 = vmatprep.subr.mxu0 0.0
        %228 = vmatpush1.msra.mxu0 0.0
        %229 = vmatprep.subr.mxu0 0.0
        %230 = vmatpush1.msra.mxu0 0.0
        %231 = vmatprep.subr.mxu0 0.0
        %232 = vmatpush1.msra.mxu0 0.0
        %233 = vmatprep.subr.mxu0 0.0
        %234 = vmatpush1.msra.mxu0 0.0
        %235 = vmatprep.subr.mxu0 0.0
        %236 = vmatpush1.msra.mxu0 0.0
        %237 = vmatprep.subr.mxu0 0.0
        %238 = vmatpush1.msra.mxu0 0.0
        %239 = vmatprep.subr.mxu0 0.0
        %240 = vmatpush1.msra.mxu0 0.0
        %241 = vmatprep.subr.mxu0 0.0
        %242 = vmatpush1.msra.mxu0 0.0
        %243 = vmatprep.subr.mxu0 0.0
        %244 = vmatpush1.msra.mxu0 0.0
        %245 = vmatprep.subr.mxu0 0.0
        %246 = vmatpush1.msra.mxu0 0.0
        %247 = vmatprep.subr.mxu0 0.0
        %248 = vmatpush1.msra.mxu0 0.0
        %249 = vmatprep.subr.mxu0 0.0
        %250 = vmatpush1.msra.mxu0 0.0
        %251 = vmatprep.subr.mxu0 0.0
        %252 = vmatpush1.msra.mxu0 %v203
        %253 = vmatprep.subr.mxu0 0.0
        %254 = vmatpush2.msra.mxu0 0.0
        %255 = vmatprep.subr.mxu0 0.0
        %256 = vmatpush2.msra.mxu0 0.0
        %257 = vmatprep.subr.mxu0 0.0
        %258 = vmatpush2.msra.mxu0 0.0
        %259 = vmatprep.subr.mxu0 0.0
        %260 = vmatpush2.msra.mxu0 0.0
        %261 = vmatprep.subr.mxu0 0.0
        %262 = vmatpush2.msra.mxu0 0.0
        %263 = vmatprep.subr.mxu0 0.0
        %264 = vmatpush2.msra.mxu0 0.0
        %265 = vmatprep.subr.mxu0 0.0
        %266 = vmatpush2.msra.mxu0 0.0
        %267 = vmatprep.subr.mxu0 0.0
        %268 = vmatpush2.msra.mxu0 0.0
        %269 = vmatprep.subr.mxu0 0.0
        %270 = vmatpush2.msra.mxu0 0.0
        %271 = vmatprep.subr.mxu0 0.0
        %272 = vmatpush2.msra.mxu0 0.0
        %273 = vmatprep.subr.mxu0 0.0
        %274 = vmatpush2.msra.mxu0 0.0
        %275 = vmatprep.subr.mxu0 0.0
        %276 = vmatpush2.msra.mxu0 0.0
        %277 = vmatprep.subr.mxu0 0.0
        %278 = vmatpush2.msra.mxu0 0.0
        %279 = vmatprep.subr.mxu0 0.0
        %280 = vmatpush2.msra.mxu0 0.0
        %281 = vmatprep.subr.mxu0 0.0
        %282 = vmatpush2.msra.mxu0 0.0
        %283 = vmatprep.subr.mxu0 0.0
        %284 = vmatpush2.msra.mxu0 0.0
        %285 = vmatprep.mubr.f32.mxu0 0.0
        %286 = vmatmul.mubr.f32.gmra.mxu0 %v210
        %v287 = vpop.f32.mrf.mxu0
        %v288 = vadd.f32 0.0, %v287
        %v289 = vpop.f32.mrf.mxu0
        %290 = vmatprep.mubr.f32.mxu0 0.0
        %291 = vmatmul.mubr.f32.gmra.mxu0 %v213
        %v292 = vpop.f32.mrf.mxu0
        %v293 = vadd.f32 0.0, %v292
        %v294 = vpop.f32.mrf.mxu0
        %295 = vmatprep.mubr.f32.mxu0 0.0
        %296 = vmatmul.mubr.f32.gmra.mxu0 %v216
        %v297 = vpop.f32.mrf.mxu0
        %v298 = vadd.f32 0.0, %v297
        %v299 = vpop.f32.mrf.mxu0
        %300 = vmatprep.mubr.f32.mxu0 0.0
        %301 = vmatmul.mubr.f32.gmra.mxu0 %v219
        %v302 = vpop.f32.mrf.mxu0
        %v303 = vadd.f32 0.0, %v302
        %v304 = vpop.f32.mrf.mxu0
        %305 = vdwg.mxu0
        %v306 = vld [vmem:[%s2] sm:$0xff]
        %v308 = vsel %vm208, %v288, 0
        %v311 = vsel %vm208, %v293, 0
        %v314 = vsel %vm208, %v298, 0
        %v317 = vsel %vm208, %v303, 0
        %319 = vmatprep.subr.mxu0 0.0
        %320 = vmatpush1.msra.mxu0 0.0
        %321 = vmatprep.subr.mxu0 0.0
        %322 = vmatpush1.msra.mxu0 0.0
        %323 = vmatprep.subr.mxu0 0.0
        %324 = vmatpush1.msra.mxu0 0.0
        %325 = vmatprep.subr.mxu0 0.0
        %326 = vmatpush1.msra.mxu0 0.0
        %327 = vmatprep.subr.mxu0 0.0
        %328 = vmatpush1.msra.mxu0 0.0
        %329 = vmatprep.subr.mxu0 0.0
        %330 = vmatpush1.msra.mxu0 0.0
        %331 = vmatprep.subr.mxu0 0.0
        %332 = vmatpush1.msra.mxu0 0.0
        %333 = vmatprep.subr.mxu0 0.0
        %334 = vmatpush1.msra.mxu0 0.0
        %335 = vmatprep.subr.mxu0 0.0
        %336 = vmatpush1.msra.mxu0 0.0
        %337 = vmatprep.subr.mxu0 0.0
        %338 = vmatpush1.msra.mxu0 0.0
        %339 = vmatprep.subr.mxu0 0.0
        %340 = vmatpush1.msra.mxu0 0.0
        %341 = vmatprep.subr.mxu0 0.0
        %342 = vmatpush1.msra.mxu0 0.0
        %343 = vmatprep.subr.mxu0 0.0
        %344 = vmatpush1.msra.mxu0 0.0
        %345 = vmatprep.subr.mxu0 0.0
        %346 = vmatpush1.msra.mxu0 0.0
        %347 = vmatprep.subr.mxu0 0.0
        %348 = vmatpush1.msra.mxu0 0.0
        %349 = vmatprep.subr.mxu0 0.0
        %350 = vmatpush1.msra.mxu0 %v306
        %351 = vmatprep.subr.mxu0 0.0
        %352 = vmatpush2.msra.mxu0 0.0
        %353 = vmatprep.subr.mxu0 0.0
        %354 = vmatpush2.msra.mxu0 0.0
        %355 = vmatprep.subr.mxu0 0.0
        %356 = vmatpush2.msra.mxu0 0.0
        %357 = vmatprep.subr.mxu0 0.0
        %358 = vmatpush2.msra.mxu0 0.0
        %359 = vmatprep.subr.mxu0 0.0
        %360 = vmatpush2.msra.mxu0 0.0
        %361 = vmatprep.subr.mxu0 0.0
        %362 = vmatpush2.msra.mxu0 0.0
        %363 = vmatprep.subr.mxu0 0.0
        %364 = vmatpush2.msra.mxu0 0.0
        %365 = vmatprep.subr.mxu0 0.0
        %366 = vmatpush2.msra.mxu0 0.0
        %367 = vmatprep.subr.mxu0 0.0
        %368 = vmatpush2.msra.mxu0 0.0
        %369 = vmatprep.subr.mxu0 0.0
        %370 = vmatpush2.msra.mxu0 0.0
        %371 = vmatprep.subr.mxu0 0.0
        %372 = vmatpush2.msra.mxu0 0.0
        %373 = vmatprep.subr.mxu0 0.0
        %374 = vmatpush2.msra.mxu0 0.0
        %375 = vmatprep.subr.mxu0 0.0
        %376 = vmatpush2.msra.mxu0 0.0
        %377 = vmatprep.subr.mxu0 0.0
        %378 = vmatpush2.msra.mxu0 0.0
        %379 = vmatprep.subr.mxu0 0.0
        %380 = vmatpush2.msra.mxu0 0.0
        %381 = vmatprep.subr.mxu0 0.0
        %382 = vmatpush2.msra.mxu0 0.0
        %383 = vmatprep.mubr.f32.mxu0 0.0
        %384 = vmatmul.mubr.f32.gmra.mxu0 %v308
        %v385 = vpop.f32.mrf.mxu0
        %v386 = vadd.f32 0.0, %v385
        %v387 = vpop.f32.mrf.mxu0
        %388 = vmatprep.mubr.f32.mxu0 0.0
        %389 = vmatmul.mubr.f32.gmra.mxu0 %v311
        %v390 = vpop.f32.mrf.mxu0
        %v391 = vadd.f32 0.0, %v390
        %v392 = vpop.f32.mrf.mxu0
        %393 = vmatprep.mubr.f32.mxu0 0.0
        %394 = vmatmul.mubr.f32.gmra.mxu0 %v314
        %v395 = vpop.f32.mrf.mxu0
        %v396 = vadd.f32 0.0, %v395
        %v397 = vpop.f32.mrf.mxu0
        %398 = vmatprep.mubr.f32.mxu0 0.0
        %399 = vmatmul.mubr.f32.gmra.mxu0 %v317
        %v400 = vpop.f32.mrf.mxu0
        %v401 = vadd.f32 0.0, %v400
        %v402 = vpop.f32.mrf.mxu0
        %403 = vdwg.mxu0
        %v404 = vmax.f32 %v386, 0.0
        %v405 = vmax.f32 %v391, 0.0
        %v406 = vmax.f32 %v396, 0.0
        %v407 = vmax.f32 %v401, 0.0
        %vm408 = vcmask 261120
        %409 = vst.msk [vmem:[%s191] sm:$0xff] %vm408, %v404
        %410 = vst.msk [vmem:[%s191 + $0x8] sm:$0xff] %vm408, %v405
        %411 = vst.msk [vmem:[%s191 + $0x10] sm:$0xff] %vm408, %v406
        %412 = vst.msk [vmem:[%s191 + $0x18] sm:$0xff] %vm408, %v407
        %s413 = sand.u32 %s112, 1
        %s414 = scalar_lea.sflag [#allocation3], %s413
        %s415 = sand.u32 %s112, 1
        %s416 = smul.addr %s415, 32
        %s417 = scalar_lea.vmem [#allocation2], %s416
        // Predicated region
        $region33: #{refine_forward.2} parent=31 // pred_check
          %p418 = pneg %p122
        $region34: #{refine_forward.2} parent=31 // pred_check_branch
          %420 = sbr.rel (%p418) target = $region36
        $region35: #{refine_forward.2} parent=31 // pred_region
          %s421 = smul.u32 4, %s22
          %s423 = ssub.s32 512, 512
          %424 = vsyncadd %s414, %s423
          %s425 = smul.addr %s21, 4
          %s426 = sadd.s32 %s421, %s425
          %s427 = smul.addr %s426, 128
          %s428 = scalar_lea.hbm %s3, %s427
          %s429 = sshll.u32 %s417, 4
          %s430 = int_to_ptr.vmem [resolvable:$true] %s429
          %435 = dma.vmem_to_hbm [thread:$0]  %s430, 512, %s428, %s414, 128, 128, 8
        $region36: #{refine_forward.2} parent=31 // pred_fallthru
          _
      $region32: #{refine_forward.2} parent=5 // pred_fallthru
        _
      %p436 = scmp.le.s32.totalorder 2, %s12
      // Predicated region
      $region37: #{refine_forward.2} parent=5 // pred_check
        %p437 = pneg %p436
      $region38: #{refine_forward.2} parent=5 // pred_check_branch
        %439 = sbr.rel (%p437) target = $region40
      $region39: #{refine_forward.2} parent=5 // pred_region
        %s440 = ssub.s32 %s12, 2
        // Predicated region
        $region41: #{refine_forward.2} parent=39 // pred_check
          %p441 = pneg %p128
        $region42: #{refine_forward.2} parent=39 // pred_check_branch
          %443 = sbr.rel (%p441) target = $region44
        $region43: #{refine_forward.2} parent=39 // pred_region
          %s444 = sand.u32 %s113, 1
          %s445 = scalar_lea.sflag [#allocation3], %s444
          %s446 = sand.u32 %s113, 1
          %s447 = smul.addr %s446, 32
          %s448 = scalar_lea.vmem [#allocation2], %s447
          %449 = dma.done %s445, 512
        $region44: #{refine_forward.2} parent=39 // pred_fallthru
          _
      $region40: #{refine_forward.2} parent=5 // pred_fallthru
        _
    $region6: #{refine_forward.2} parent=1 // loop_footer
      %s16 = sadd.s32 1, %s12
    $region7: #{refine_forward.2} parent=1 // loop_footer_branch
      %11 = sbr.rel target = $region3
    $region8: #{refine_forward.2} parent=1 // loop_exit
      _
    %450 = vsyncpa [#allocation3], 1
    %s451 = scalar_lea.sflag [#allocation3], 1
    %452 = vsyncpa %s451, 1

</llo_original>
